<compile_context>
chip_gen: v7x
topology: tpu7x:2x2x1
jax: 0.10.0
libtpu: 0.0.40
codegen_flags: <defaults>
</compile_context>

<pallas_src>
import functools

import jax
import jax.numpy as jnp
from jax import lax
from jax.experimental import pallas as pl
from jax.experimental.pallas import tpu as pltpu

_reduction_modes = ("none", "mean", "sum")

# ---- VMEM sizing derived from the chip (v7x: 64 MiB/TC; v5e/v6e: 128 MiB) ----
try:
    _VMEM_CAP = int(pltpu.get_tpu_info().vmem_capacity_bytes)
except Exception:  # conservative fallback if the query is unavailable
    _VMEM_CAP = 64 * 1024 * 1024
_VMEM_BUDGET = max(8 * 1024 * 1024, min(_VMEM_CAP // 4, 32 * 1024 * 1024))
_VMEM_LIMIT = max(2 * _VMEM_BUDGET, min(_VMEM_CAP // 2, 64 * 1024 * 1024))


def _round_up(x, m):
    return (x + m - 1) // m * m


def _choose_tiles(rows, cols, per_elem_bytes, budget):
    """Pick (tr, tc) purely from the VMEM byte budget (no divisibility
    requirement — the grids use cdiv and the tail block is masked / clamped).
    tr is additionally capped so the row ('parallel') axis has >= 2 iterations
    whenever possible, keeping both v7x TensorCores streaming HBM."""
    Rp = _round_up(rows, 8)
    Cp = _round_up(cols, 128)
    if 8 * Cp * per_elem_bytes <= budget:
        tc = Cp
        tr = min(Rp, max(8, (budget // (Cp * per_elem_bytes)) // 8 * 8))
    else:
        tr = 8
        tc = min(Cp, max(128, (budget // (8 * per_elem_bytes)) // 128 * 128))
    if Rp >= 16:
        tr = min(tr, _round_up(pl.cdiv(Rp, 2), 8))
    return tr, tc


def _choose_chunk(tc):
    for c in (512, 256, 128):
        if tc % c == 0:
            return c
    return 128


def _edge_mask(shape, row_off, col_off, rows, cols, mask_rows, mask_cols):
    """Validity mask for the tail tile (None when the shape is tile-aligned)."""
    m = None
    if mask_rows:
        rid = lax.broadcasted_iota(jnp.int32, shape, 0) + row_off
        m = rid < rows
    if mask_cols:
        cid = lax.broadcasted_iota(jnp.int32, shape, 1) + col_off
        cm = cid < cols
        m = cm if m is None else jnp.logical_and(m, cm)
    return m


def _lane_reduce(v, chunk):
    """(8, chunk) -> (8, 128) via <=3 VPU adds (chunk <= 512)."""
    out = v[:, 0:128]
    for c in range(1, chunk // 128):
        out = out + v[:, c * 128:(c + 1) * 128]
    return out


# ------------------------- elementwise ('none') kernels -------------------------

def _mse_none_nw_kernel(lw_ref, pred_ref, tgt_ref, out_ref):
    lw = lw_ref[0]
    d = pred_ref[...].astype(jnp.float32) - tgt_ref[...].astype(jnp.float32)
    out_ref[...] = (d * d * lw).astype(out_ref.dtype)


def _mse_none_w_kernel(lw_ref, pred_ref, tgt_ref, w_ref, out_ref):
    # Works for both full (tr, tc) weights and (tr, 1) row-broadcast weights.
    lw = lw_ref[0]
    d = pred_ref[...].astype(jnp.float32) - tgt_ref[...].astype(jnp.float32)
    wv = w_ref[...].astype(jnp.float32)
    out_ref[...] = (d * d * wv * lw).astype(out_ref.dtype)


# ------------------------- reduction ('sum'/'mean') kernels -------------------------

def _mse_sum_nw_kernel(cfg, pred_ref, tgt_ref, part_ref, acc_ref):
    tr, tc, chunk, rows, cols, mask_r, mask_c = cfg
    j = pl.program_id(1)

    @pl.when(j == 0)
    def _():
        acc_ref[...] = jnp.zeros_like(acc_ref)

    row_base = pl.program_id(0) * tr
    col_base = j * tc

    def col_body(s, c, acc):
        r0 = pl.multiple_of(s * 8, 8)
        c0 = pl.multiple_of(c * chunk, chunk)
        p = pred_ref[pl.ds(r0, 8), pl.ds(c0, chunk)].astype(jnp.float32)
        t = tgt_ref[pl.ds(r0, 8), pl.ds(c0, chunk)].astype(jnp.float32)
        d = p - t
        v = d * d
        m = _edge_mask((8, chunk), row_base + r0, col_base + c0,
                       rows, cols, mask_r, mask_c)
        if m is not None:
            v = jnp.where(m, v, 0.0)
        return acc + _lane_reduce(v, chunk)

    def row_body(s, acc):
        return lax.fori_loop(0, tc // chunk, lambda c, a: col_body(s, c, a), acc)

    acc_ref[...] = lax.fori_loop(0, tr // 8, row_body, acc_ref[...])

    @pl.when(j == pl.num_programs(1) - 1)
    def _():
        part_ref[...] = acc_ref[...]


def _mse_sum_roww_kernel(cfg, pred_ref, tgt_ref, w_ref, part_ref, acc_ref):
    # Weight broadcast over the column axis; denominator is computed host-side
    # from the tiny (rows, 1) weight, so only the loss sum is accumulated here.
    tr, tc, chunk, rows, cols, mask_r, mask_c = cfg
    j = pl.program_id(1)

    @pl.when(j == 0)
    def _():
        acc_ref[...] = jnp.zeros_like(acc_ref)

    row_base = pl.program_id(0) * tr
    col_base = j * tc

    def col_body(s, c, acc):
        r0 = pl.multiple_of(s * 8, 8)
        c0 = pl.multiple_of(c * chunk, chunk)
        p = pred_ref[pl.ds(r0, 8), pl.ds(c0, chunk)].astype(jnp.float32)
        t = tgt_ref[pl.ds(r0, 8), pl.ds(c0, chunk)].astype(jnp.float32)
        ws = w_ref[pl.ds(r0, 8), :].astype(jnp.float32)     # (8, 1) lane-broadcast
        d = p - t
        v = d * d * ws
        m = _edge_mask((8, chunk), row_base + r0, col_base + c0,
                       rows, cols, mask_r, mask_c)
        if m is not None:
            v = jnp.where(m, v, 0.0)
        return acc + _lane_reduce(v, chunk)

    def row_body(s, acc):
        return lax.fori_loop(0, tc // chunk, lambda c, a: col_body(s, c, a), acc)

    acc_ref[...] = lax.fori_loop(0, tr // 8, row_body, acc_ref[...])

    @pl.when(j == pl.num_programs(1) - 1)
    def _():
        part_ref[...] = acc_ref[...]


def _mse_sum_fullw_kernel(cfg, pred_ref, tgt_ref, w_ref,
                          lpart_ref, wpart_ref, acc_l, acc_w):
    tr, tc, chunk, rows, cols, mask_r, mask_c = cfg
    j = pl.program_id(1)

    @pl.when(j == 0)
    def _():
        acc_l[...] = jnp.zeros_like(acc_l)
        acc_w[...] = jnp.zeros_like(acc_w)

    row_base = pl.program_id(0) * tr
    col_base = j * tc

    def col_body(s, c, carry):
        al, aw = carry
        r0 = pl.multiple_of(s * 8, 8)
        c0 = pl.multiple_of(c * chunk, chunk)
        p = pred_ref[pl.ds(r0, 8), pl.ds(c0, chunk)].astype(jnp.float32)
        t = tgt_ref[pl.ds(r0, 8), pl.ds(c0, chunk)].astype(jnp.float32)
        wv = w_ref[pl.ds(r0, 8), pl.ds(c0, chunk)].astype(jnp.float32)
        d = p - t
        v = d * d * wv
        m = _edge_mask((8, chunk), row_base + r0, col_base + c0,
                       rows, cols, mask_r, mask_c)
        if m is not None:
            v = jnp.where(m, v, 0.0)
            wv = jnp.where(m, wv, 0.0)
        return al + _lane_reduce(v, chunk), aw + _lane_reduce(wv, chunk)

    def row_body(s, carry):
        return lax.fori_loop(0, tc // chunk, lambda c, cr: col_body(s, c, cr), carry)

    al, aw = lax.fori_loop(0, tr // 8, row_body, (acc_l[...], acc_w[...]))
    acc_l[...] = al
    acc_w[...] = aw

    @pl.when(j == pl.num_programs(1) - 1)
    def _():
        lpart_ref[...] = acc_l[...]
        wpart_ref[...] = acc_w[...]


# ------------------------- wrapper -------------------------

def mse_loss_pallas(pred, target, weight=None, *, reduction="mean", loss_weight=1.0):
    if reduction not in _reduction_modes:
        raise ValueError(
            f"Unsupported reduction mode: {reduction}. "
            f"Supported ones are: {list(_reduction_modes)}")

    n, c, h, w = pred.shape
    rows, cols = n * c, h * w

    pred2 = pred.reshape(rows, cols)
    tgt2 = target.reshape(rows, cols)

    w_mode = "none"
    w2 = None
    if weight is not None:
        if weight.shape == pred.shape:
            w_mode = "full"
            w2 = weight.reshape(rows, cols)
        elif weight.ndim == 4 and weight.shape[2] == 1 and weight.shape[3] == 1:
            # Per-channel / per-sample weight: keep the tiny (rows, 1) weight and
            # broadcast it along lanes inside the kernel — no full-size HBM stream.
            w_mode = "row"
            w2 = jnp.broadcast_to(weight, (n, c, 1, 1)).astype(pred.dtype).reshape(rows, 1)
        else:
            # TODO(synk): fold other broadcast layouts in-kernel instead of
            # materializing the full-size weight here.
            w_mode = "full"
            w2 = jnp.broadcast_to(weight, pred.shape).reshape(rows, cols)

    itemsize = jnp.dtype(pred.dtype).itemsize

    # ---------------- reduction == 'none' ----------------
    if reduction == "none":
        n_streams = 4 if w_mode == "full" else 3          # pred + tgt (+w) + out
        per_elem = 2 * n_streams * itemsize + 12           # double-buffered + f32 temps
        tr, tc = _choose_tiles(rows, cols, per_elem, _VMEM_BUDGET)
        grid = (pl.cdiv(rows, tr), pl.cdiv(cols, tc))

        lw_arr = jnp.asarray(loss_weight, dtype=jnp.float32).reshape((1,))

        io_spec = pl.BlockSpec((tr, tc), lambda i, j, lw: (i, j))
        in_specs = [io_spec, io_spec]
        operands = [pred2, tgt2]
        kernel = _mse_none_nw_kernel
        if w_mode == "full":
            in_specs.append(io_spec)
            operands.append(w2)
            kernel = _mse_none_w_kernel
        elif w_mode == "row":
            in_specs.append(pl.BlockSpec((tr, 1), lambda i, j, lw: (i, 0)))
            operands.append(w2)
            kernel = _mse_none_w_kernel

        out2 = pl.pallas_call(
            kernel,
            out_shape=jax.ShapeDtypeStruct((rows, cols), pred.dtype),
            grid_spec=pltpu.PrefetchScalarGridSpec(
                num_scalar_prefetch=1,
                grid=grid,
                in_specs=in_specs,
                out_specs=io_spec,
            ),
            compiler_params=pltpu.CompilerParams(
                dimension_semantics=("parallel", "parallel"),
                vmem_limit_bytes=_VMEM_LIMIT),
        )(lw_arr, *operands)

        return out2.reshape(n, c, h, w)

    # ---------------- reduction == 'sum' / 'mean' ----------------
    heavy_streams = 3 if w_mode == "full" else 2            # row-weight stream negligible
    per_elem = 2 * heavy_streams * itemsize + 4              # double-buffered inputs
    tr, tc = _choose_tiles(rows, cols, per_elem, _VMEM_BUDGET)
    chunk = _choose_chunk(tc)
    gr = pl.cdiv(rows, tr)
    gc = pl.cdiv(cols, tc)
    cfg = (tr, tc, chunk, rows, cols, rows % tr != 0, cols % tc != 0)

    io_spec = pl.BlockSpec((tr, tc), lambda i, j: (i, j))
    part_spec = pl.BlockSpec((8, 128), lambda i, j: (0, i))
    in_specs = [io_spec, io_spec]
    operands = [pred2, tgt2]

    if w_mode == "none":
        kernel = functools.partial(_mse_sum_nw_kernel, cfg)
        out_shape = jax.ShapeDtypeStruct((8, gr * 128), jnp.float32)
        out_specs = part_spec
        scratch = [pltpu.VMEM((8, 128), jnp.float32)]
    elif w_mode == "row":
        kernel = functools.partial(_mse_sum_roww_kernel, cfg)
        in_specs.append(pl.BlockSpec((tr, 1), lambda i, j: (i, 0)))
        operands.append(w2)
        out_shape = jax.ShapeDtypeStruct((8, gr * 128), jnp.float32)
        out_specs = part_spec
        scratch = [pltpu.VMEM((8, 128), jnp.float32)]
    else:  # full weight: accumulate the weight sum in-kernel (mean denominator)
        kernel = functools.partial(_mse_sum_fullw_kernel, cfg)
        in_specs.append(io_spec)
        operands.append(w2)
        out_shape = (jax.ShapeDtypeStruct((8, gr * 128), jnp.float32),
                     jax.ShapeDtypeStruct((8, gr * 128), jnp.float32))
        out_specs = [part_spec, part_spec]
        scratch = [pltpu.VMEM((8, 128), jnp.float32),
                   pltpu.VMEM((8, 128), jnp.float32)]

    res = pl.pallas_call(
        kernel,
        out_shape=out_shape,
        grid_spec=pltpu.PrefetchScalarGridSpec(
            num_scalar_prefetch=0,
            grid=(gr, gc),
            in_specs=in_specs,
            out_specs=out_specs,
            scratch_shapes=scratch,
        ),
        compiler_params=pltpu.CompilerParams(
            dimension_semantics=("parallel", "arbitrary"),
            vmem_limit_bytes=_VMEM_LIMIT),
    )(*operands)

    if w_mode == "full":
        loss_parts, w_parts = res
        loss_sum = jnp.sum(loss_parts)
        denom = jnp.sum(w_parts)
    elif w_mode == "row":
        loss_sum = jnp.sum(res)
        denom = jnp.sum(w2.astype(jnp.float32)) * float(cols)
    else:
        loss_sum = jnp.sum(res)
        denom = float(rows * cols)

    if reduction == "sum":
        result = loss_sum
    else:  # 'mean' (masked_loss semantics: divide by sum of broadcast weight)
        result = loss_sum / denom
    return (loss_weight * result).astype(pred.dtype)


class MSELoss:
    """MSE (L2) loss backed by a Pallas TPU kernel."""

    def __init__(self, loss_weight=1.0, reduction="mean"):
        if reduction not in _reduction_modes:
            raise ValueError(
                f"Unsupported reduction mode: {reduction}. "
                f"Supported ones are: {list(_reduction_modes)}")
        self.loss_weight = loss_weight
        self.reduction = reduction

    def __call__(self, pred, target, weight=None, **kwargs):
        return mse_loss_pallas(pred, target, weight,
                               reduction=self.reduction,
                               loss_weight=self.loss_weight)


# ------------------------- demo -------------------------

if __name__ == "__main__":
    key = jax.random.PRNGKey(0)
    k1, k2, k3, k4 = jax.random.split(key, 4)

    N, C, H, W = 2, 4, 16, 16
    pred = jax.random.normal(k1, (N, C, H, W), dtype=jnp.float32)
    target = jax.random.normal(k2, (N, C, H, W), dtype=jnp.float32)
    weight = jax.random.uniform(k3, (N, C, H, W), dtype=jnp.float32)
    ch_weight = jax.random.uniform(k4, (N, C, 1, 1), dtype=jnp.float32)

    # mean (default, no weight)
    loss_mean = MSELoss(loss_weight=1.0, reduction="mean")(pred, target)
    jax.block_until_ready(loss_mean)
    ref_mean = jnp.mean((pred - target) ** 2)
    assert jnp.allclose(loss_mean, ref_mean, rtol=1e-5, atol=1e-5)

    # sum
    loss_sum = MSELoss(loss_weight=0.5, reduction="sum")(pred, target)
    ref_sum = 0.5 * jnp.sum((pred - target) ** 2)
    assert jnp.allclose(loss_sum, ref_sum, rtol=1e-5, atol=1e-4)

    # none + elementwise weight
    loss_none = MSELoss(loss_weight=2.0, reduction="none")(pred, target, weight)
    ref_none = 2.0 * weight * (pred - target) ** 2
    assert loss_none.shape == (N, C, H, W)
    assert jnp.allclose(loss_none, ref_none, rtol=1e-5, atol=1e-5)

    # none, no weight
    loss_none_nw = MSELoss(loss_weight=1.0, reduction="none")(pred, target)
    assert jnp.allclose(loss_none_nw, (pred - target) ** 2, rtol=1e-5, atol=1e-5)

    # weighted mean (masked_loss semantics: divide by sum of broadcast weight)
    loss_wmean = MSELoss(reduction="mean")(pred, target, weight)
    ref_wmean = jnp.sum(weight * (pred - target) ** 2) / jnp.sum(weight)
    assert jnp.allclose(loss_wmean, ref_wmean, rtol=1e-5, atol=1e-5)

    # weighted sum
    loss_wsum = MSELoss(reduction="sum")(pred, target, weight)
    ref_wsum = jnp.sum(weight * (pred - target) ** 2)
    assert jnp.allclose(loss_wsum, ref_wsum, rtol=1e-5, atol=1e-4)

    # per-channel (N, C, 1, 1) weight: folded in-kernel, no full-size broadcast
    wch_b = jnp.broadcast_to(ch_weight, pred.shape)
    loss_cmean = MSELoss(reduction="mean")(pred, target, ch_weight)
    ref_cmean = jnp.sum(wch_b * (pred - target) ** 2) / jnp.sum(wch_b)
    assert jnp.allclose(loss_cmean, ref_cmean, rtol=1e-5, atol=1e-5)
    loss_cnone = MSELoss(reduction="none")(pred, target, ch_weight)
    assert jnp.allclose(loss_cnone, wch_b * (pred - target) ** 2, rtol=1e-5, atol=1e-5)

    # unaligned shape: exercises the cdiv-grid + in-kernel edge-masking path
    N2, C2, H2, W2 = 3, 5, 7, 9
    p2 = jax.random.normal(k1, (N2, C2, H2, W2), dtype=jnp.float32)
    t2 = jax.random.normal(k2, (N2, C2, H2, W2), dtype=jnp.float32)
    loss_u_mean = MSELoss(reduction="mean")(p2, t2)
    assert jnp.allclose(loss_u_mean, jnp.mean((p2 - t2) ** 2), rtol=1e-5, atol=1e-5)
    loss_u_none = MSELoss(reduction="none")(p2, t2)
    assert jnp.allclose(loss_u_none, (p2 - t2) ** 2, rtol=1e-5, atol=1e-5)

    jax.block_until_ready(loss_u_none)
    print("KERNEL_OK")
</pallas_src>

<mosaic_0001>
module attributes {stable_mosaic.version = 11 : i64} {
  func.func @_mse_sum_nw_kernel(%arg0: i32, %arg1: i32, %arg2: memref<8x256xf32, #tpu.memory_space<vmem>>, %arg3: memref<8x256xf32, #tpu.memory_space<vmem>>, %arg4: memref<8x128xf32, #tpu.memory_space<vmem>>, %arg5: memref<8x128xf32, #tpu.memory_space<vmem>>) attributes {dimension_semantics = [#tpu.dimension_semantics<parallel>, #tpu.dimension_semantics<arbitrary>], iteration_bounds = array<i64: 1, 1>, scalar_prefetch = 0 : i64, scratch_operands = 1 : i64, tpu.core_type = #tpu.core_type<tc>, window_params = [{transform_indices = @transform_0, window_bounds = array<i64: 8, 256>}, {transform_indices = @transform_1, window_bounds = array<i64: 8, 256>}, {transform_indices = @transform_2, window_bounds = array<i64: 8, 128>}]} {
    %c0_i32 = arith.constant 0 : i32
    %0 = arith.cmpi eq, %arg1, %c0_i32 : i32
    %1 = arith.extui %0 : i1 to i32
    %c0_i32_0 = arith.constant 0 : i32
    %2 = arith.cmpi ne, %1, %c0_i32_0 : i32
    scf.if %2 {
      %cst = arith.constant 0.000000e+00 : f32
      %24 = vector.broadcast %cst : f32 to vector<8x128xf32>
      %c0_9 = arith.constant 0 : index
      %c0_10 = arith.constant 0 : index
      %25 = vector.load %arg5[%c0_9, %c0_10] : memref<8x128xf32, #tpu.memory_space<vmem>>, vector<8x128xf32>
      tpu.vector_store %arg5[%c0_9, %c0_10], %24 {strides = array<i32>} : memref<8x128xf32, #tpu.memory_space<vmem>>, vector<8x128xf32>,
    } else {
    }
    %c0 = arith.constant 0 : index
    %c0_1 = arith.constant 0 : index
    %3 = vector.load %arg5[%c0, %c0_1] : memref<8x128xf32, #tpu.memory_space<vmem>>, vector<8x128xf32>
    %c0_i32_2 = arith.constant 0 : i32
    %c0_i32_3 = arith.constant 0 : i32
    %c8_i32 = arith.constant 8 : i32
    %4 = arith.muli %c0_i32_2, %c8_i32 : i32
    %5 = tpu.assume_multiple %4, 8 : i32
    %c256_i32 = arith.constant 256 : i32
    %6 = arith.muli %c0_i32_3, %c256_i32 : i32
    %7 = tpu.assume_multiple %6, 256 : i32
    %8 = arith.index_cast %5 : i32 to index
    %9 = arith.index_cast %7 : i32 to index
    %10 = vector.load %arg2[%8, %9] : memref<8x256xf32, #tpu.memory_space<vmem>>, vector<8x256xf32>
    %11 = arith.index_cast %5 : i32 to index
    %12 = arith.index_cast %7 : i32 to index
    %13 = vector.load %arg3[%11, %12] : memref<8x256xf32, #tpu.memory_space<vmem>>, vector<8x256xf32>
    %14 = arith.subf %10, %13 : vector<8x256xf32>
    %15 = arith.mulf %14, %14 : vector<8x256xf32>
    %16 = vector.extract_strided_slice %15 {offsets = [0, 0], sizes = [8, 128], strides = [1, 1]} : vector<8x256xf32> to vector<8x128xf32>
    %17 = vector.extract_strided_slice %15 {offsets = [0, 128], sizes = [8, 128], strides = [1, 1]} : vector<8x256xf32> to vector<8x128xf32>
    %18 = arith.addf %16, %17 : vector<8x128xf32>
    %19 = arith.addf %3, %18 : vector<8x128xf32>
    %c1_i32 = arith.constant 1 : i32
    %c1_i32_4 = arith.constant 1 : i32
    %c0_5 = arith.constant 0 : index
    %c0_6 = arith.constant 0 : index
    %20 = vector.load %arg5[%c0_5, %c0_6] : memref<8x128xf32, #tpu.memory_space<vmem>>, vector<8x128xf32>
    tpu.vector_store %arg5[%c0_5, %c0_6], %19 {strides = array<i32>} : memref<8x128xf32, #tpu.memory_space<vmem>>, vector<8x128xf32>,
    %c0_i32_7 = arith.constant 0 : i32
    %21 = arith.cmpi eq, %arg1, %c0_i32_7 : i32
    %22 = arith.extui %21 : i1 to i32
    %c0_i32_8 = arith.constant 0 : i32
    %23 = arith.cmpi ne, %22, %c0_i32_8 : i32
    scf.if %23 {
      %c0_9 = arith.constant 0 : index
      %c0_10 = arith.constant 0 : index
      %24 = vector.load %arg5[%c0_9, %c0_10] : memref<8x128xf32, #tpu.memory_space<vmem>>, vector<8x128xf32>
      %c0_11 = arith.constant 0 : index
      %c0_12 = arith.constant 0 : index
      %25 = vector.load %arg4[%c0_11, %c0_12] : memref<8x128xf32, #tpu.memory_space<vmem>>, vector<8x128xf32>
      tpu.vector_store %arg4[%c0_11, %c0_12], %24 {strides = array<i32>} : memref<8x128xf32, #tpu.memory_space<vmem>>, vector<8x128xf32>,
    } else {
    }
    return
  }
  func.func @transform_0(%arg0: i32, %arg1: i32) -> (i32, i32) {
    %c0_i32 = arith.constant 0 : i32
    return %arg0, %arg1 : i32, i32
  }
  func.func @transform_1(%arg0: i32, %arg1: i32) -> (i32, i32) {
    %c0_i32 = arith.constant 0 : i32
    return %arg0, %arg1 : i32, i32
  }
  func.func @transform_2(%arg0: i32, %arg1: i32) -> (i32, i32) {
    %c0_i32 = arith.constant 0 : i32
    %c0_i32_0 = arith.constant 0 : i32
    return %c0_i32, %arg0 : i32, i32
  }
}

</mosaic_0001>

<llo_original>
// kernel: tpu_custom_call.1
$region0: #{tpu_custom_call.1}
  #allocation0 [shape = 'u32[]', space=smem, size = 0x4, offset = 0x4, fixed_abs, tag = 'smem constant byte address 0x4 - core index']
  #allocation1 [shape = 'u32[144,128]{1,0:T(1,128)}', space=vmem, size = 0x12000, scoped, tag = 'internal scratch']
  #allocation2 [shape = 'f32[8,128]{1,0:T(8,128)}', space=vmem, size = 0x1000, scoped, tag = 'scratch operand']
  %s0 = inlined_call_operand.hbm [shape: f32[8,256], index: 0, kind: input, shape index: {}]
  %s1 = inlined_call_operand.hbm [shape: f32[8,256], index: 1, kind: input, shape index: {}]
  %s2 = inlined_call_operand.hbm [shape: f32[8,128], index: 2, kind: output, shape index: {}]
  %s3 = sld [smem:[#allocation0]]
  $region34: #{tpu_custom_call.1} parent=0
    _
  %s5 = ssub.s32 1, %s3
  %s6 = scalar_select 0, %s5, %s3
  $region1: #{tpu_custom_call.1} parent=0
    #allocation3 [shape = 'u8[8192]{0}', space=vmem, size = 0x2000, scoped, tag = 'input window, operand 0, single buffered']
    #allocation4 [shape = 's32[1]{0}', space=sflag, size = 0x4, scoped, tag = 'scoped memory for tpu_custom_call.1']
    #allocation5 [shape = 's32[1]{0}', space=sflag, size = 0x4, scoped, tag = 'scoped memory for tpu_custom_call.1']
    #allocation6 [shape = 'u8[8192]{0}', space=vmem, size = 0x2000, scoped, tag = 'input window, operand 1, single buffered']
    #allocation7 [shape = 's32[1]{0}', space=sflag, size = 0x4, scoped, tag = 'scoped memory for tpu_custom_call.1']
    #allocation8 [shape = 'u8[4096]{0}', space=vmem, size = 0x1000, scoped, tag = 'output window, operand 0, single buffered']
    %7 = vsyncpa [#allocation4], 0
    %8 = vsyncpa [#allocation7], 0
    %9 = vsyncpa [#allocation5], 0
    // Predicated region
    $region2: #{tpu_custom_call.1} parent=1 // pred_check
      _
    $region3: #{tpu_custom_call.1} parent=1 // pred_check_branch
      %11 = sbr.rel (0) target = $region5
    $region4: #{tpu_custom_call.1} parent=1 // pred_region
      %s13 = ssub.s32 256, 256
      %14 = vsyncadd [#allocation4], %s13
      %s16 = sshll.u32 [#allocation3], 4
      %s17 = int_to_ptr.vmem [resolvable:$true] %s16
      %19 = dma.hbm_to_vmem [thread:$0]  %s0, 256, %s17, [#allocation4]
    $region5: #{tpu_custom_call.1} parent=1 // pred_fallthru
      _
    // Predicated region
    $region6: #{tpu_custom_call.1} parent=1 // pred_check
      _
    $region7: #{tpu_custom_call.1} parent=1 // pred_check_branch
      %21 = sbr.rel (0) target = $region9
    $region8: #{tpu_custom_call.1} parent=1 // pred_region
      %s23 = ssub.s32 256, 256
      %24 = vsyncadd [#allocation7], %s23
      %s26 = sshll.u32 [#allocation6], 4
      %s27 = int_to_ptr.vmem [resolvable:$true] %s26
      %29 = dma.hbm_to_vmem [thread:$0]  %s1, 256, %s27, [#allocation7]
    $region9: #{tpu_custom_call.1} parent=1 // pred_fallthru
      _
    // Predicated region
    $region10: #{tpu_custom_call.1} parent=1 // pred_check
      _
    $region11: #{tpu_custom_call.1} parent=1 // pred_check_branch
      %31 = sbr.rel (0) target = $region13
    $region12: #{tpu_custom_call.1} parent=1 // pred_region
      %32 = dma.done [#allocation4], 256
    $region13: #{tpu_custom_call.1} parent=1 // pred_fallthru
      _
    // Predicated region
    $region14: #{tpu_custom_call.1} parent=1 // pred_check
      _
    $region15: #{tpu_custom_call.1} parent=1 // pred_check_branch
      %34 = sbr.rel (0) target = $region17
    $region16: #{tpu_custom_call.1} parent=1 // pred_region
      %35 = dma.done [#allocation7], 256
    $region17: #{tpu_custom_call.1} parent=1 // pred_fallthru
      _
    %p36 = scmp.eq.s32.totalorder 0, 0
    // Predicated region
    $region18: #{tpu_custom_call.1} parent=1 // pred_check
      %p37 = pneg %p36
    $region19: #{tpu_custom_call.1} parent=1 // pred_check_branch
      %39 = sbr.rel (%p37) target = $region21
    $region20: #{tpu_custom_call.1} parent=1 // pred_region
      %40 = vst [vmem:[#allocation2] sm:$0xff] 0.0
    $region21: #{tpu_custom_call.1} parent=1 // pred_fallthru
      _
    %v41 = vld [vmem:[#allocation2] sm:$0xff]
    %s42 = smul.u32 0, 2
    %s43 = sadd.s32 0, %s42
    %s44 = smul.addr %s43, 8
    %s45 = scalar_lea.vmem [#allocation3], %s44
    %v46 = vld [vmem:[%s45] sm:$0xff]
    %v47 = vld [vmem:[%s45 + $0x8] sm:$0xff]
    %s48 = smul.addr %s43, 8
    %s49 = scalar_lea.vmem [#allocation6], %s48
    %v50 = vld [vmem:[%s49] sm:$0xff]
    %v51 = vld [vmem:[%s49 + $0x8] sm:$0xff]
    %v52 = vsub.f32 %v46, %v50
    %v53 = vsub.f32 %v47, %v51
    %v54 = vmul.f32 %v52, %v52
    %v55 = vmul.f32 %v53, %v53
    %v56 = vadd.f32 %v54, %v55
    %v57 = vadd.f32 %v41, %v56
    %58 = vst [vmem:[#allocation2] sm:$0xff] %v57
    // Predicated region
    $region22: #{tpu_custom_call.1} parent=1 // pred_check
      %p59 = pneg %p36
    $region23: #{tpu_custom_call.1} parent=1 // pred_check_branch
      %61 = sbr.rel (%p59) target = $region25
    $region24: #{tpu_custom_call.1} parent=1 // pred_region
      %v62 = vld [vmem:[#allocation2] sm:$0xff]
      %63 = vst [vmem:[#allocation8] sm:$0xff] %v62
    $region25: #{tpu_custom_call.1} parent=1 // pred_fallthru
      _
    // Predicated region
    $region26: #{tpu_custom_call.1} parent=1 // pred_check
      _
    $region27: #{tpu_custom_call.1} parent=1 // pred_check_branch
      %65 = sbr.rel (0) target = $region29
    $region28: #{tpu_custom_call.1} parent=1 // pred_region
      %s67 = ssub.s32 128, 128
      %68 = vsyncadd [#allocation5], %s67
      %s70 = sshll.u32 [#allocation8], 4
      %s71 = int_to_ptr.vmem [resolvable:$true] %s70
      %73 = dma.vmem_to_hbm [thread:$0]  %s71, 128, %s2, [#allocation5]
    $region29: #{tpu_custom_call.1} parent=1 // pred_fallthru
      _
    // Predicated region
    $region30: #{tpu_custom_call.1} parent=1 // pred_check
      _
    $region31: #{tpu_custom_call.1} parent=1 // pred_check_branch
      %75 = sbr.rel (0) target = $region33
    $region32: #{tpu_custom_call.1} parent=1 // pred_region
      %76 = dma.done [#allocation5], 128
    $region33: #{tpu_custom_call.1} parent=1 // pred_fallthru
      _
    %77 = vsyncpa [#allocation4], 1
    %78 = vsyncpa [#allocation7], 1
    %79 = vsyncpa [#allocation5], 1

</llo_original>
